<compile_context>
chip_gen: v5e
topology: v5e:2x2
jax: 0.10.0
libtpu: 0.0.40
codegen_flags: <defaults>
</compile_context>

<pallas_src>
import jax
import jax.numpy as jnp
from jax.experimental import pallas as pl
from jax.experimental.pallas import tpu as pltpu


def _round_up(n, m):
    return ((n + m - 1) // m) * m


def _mlp_kernel(x_ref, w1_ref, b1_ref, w2_ref, b2_ref, w3_ref, b3_ref, o_ref):
    # x_ref: (BT, n_obs) f32 (batch tile).
    # w1: (64, n_obs) bf16; w2: (64, 64) bf16; w3: (1, 64) bf16  (PyTorch layout).
    # b1/b2: (64, 1) f32; b3: (1, 1) f32.
    # o_ref: (1, BT) f32  -- lane-dense output row for this batch tile.

    # Cast x to bf16 on the VPU (in-kernel, so HBM only ever sees f32 x once).
    x_bf16 = x_ref[...].astype(jnp.bfloat16)                        # (BT, n_obs)

    # Layer 1: contract over the feature dim of BOTH operands (trans_b form,
    # same dimension_numbers the TPU flash-attention kernels use), so the batch
    # dim lands on the MXU N / lane axis: result is (64, BT), lane-dense.
    h1 = jax.lax.dot_general(
        w1_ref[...], x_bf16,
        dimension_numbers=(((1,), (1,)), ((), ())),
        preferred_element_type=jnp.float32)                         # (64, BT)
    h1 = jnp.maximum(h1 + b1_ref[...], 0.0)                         # bias col bcast + ReLU

    # Layer 2: canonical MXU matmul, activations stay (64, BT).
    h2 = jnp.dot(w2_ref[...], h1.astype(jnp.bfloat16),
                 preferred_element_type=jnp.float32)                # (64, BT)
    h2 = jnp.maximum(h2 + b2_ref[...], 0.0)

    # Layer 3 (64 -> 1): M=1 matmul; the (1, BT) result is lane-dense so the
    # store path uses full-width vst instead of 1-of-128-lane masked stores.
    out = jnp.dot(w3_ref[...], h2.astype(jnp.bfloat16),
                  preferred_element_type=jnp.float32)               # (1, BT)
    o_ref[...] = (out + b3_ref[...]).astype(o_ref.dtype)


def value_approximator(x, params, *, block_rows=8192):
    """Fused MLP forward pass (PyTorch ValueApproximator semantics).

    Args:
      x: [B, n_observations] float32.
      params: dict with PyTorch-layout weights:
              w1 [64, n_obs], b1 [64, 1], w2 [64, 64], b2 [64, 1],
              w3 [1, 64],    b3 [1, 1]   (all float32).
      block_rows: batch-tile size (rows per grid step); multiple of 128,
                  sweepable. Default 8192 keeps the double-buffered f32 x tile
                  plus intermediates well under v5e's 16 MiB scoped VMEM.
    Returns:
      [B, 1] float32 value estimates.
    """
    B, n_obs = x.shape
    hidden = params["w1"].shape[0]
    x = x.astype(jnp.float32)

    # Batch tile selection: multiple of 128 (lane-dense output rows), and at
    # least 2 grid steps whenever B > 128 so both v7x TensorCores get work.
    block_rows = max(128, block_rows - block_rows % 128)
    if B <= 128:
        BT = B                                   # single full-array block
    else:
        BT = min(block_rows, _round_up(B, 128))
        if pl.cdiv(B, BT) == 1:                  # would leave a v7x core idle
            BT = _round_up(pl.cdiv(B, 2), 128)
    num_steps = pl.cdiv(B, BT)

    # Weights are tiny and VMEM-resident; pre-cast them to bf16 once.
    w1 = params["w1"].astype(jnp.bfloat16)
    w2 = params["w2"].astype(jnp.bfloat16)
    w3 = params["w3"].astype(jnp.bfloat16)
    b1, b2, b3 = params["b1"], params["b2"], params["b3"]

    const = lambda shape: pl.BlockSpec(shape, lambda i: (0, 0))

    out = pl.pallas_call(
        _mlp_kernel,
        out_shape=jax.ShapeDtypeStruct((num_steps, BT), jnp.float32),
        grid=(num_steps,),
        in_specs=[
            pl.BlockSpec((BT, n_obs), lambda i: (i, 0)),   # x: tiled over batch
            const((hidden, n_obs)),                        # w1 (resident)
            const((hidden, 1)),                            # b1
            const((hidden, hidden)),                       # w2
            const((hidden, 1)),                            # b2
            const((1, hidden)),                            # w3
            const((1, 1)),                                 # b3
        ],
        out_specs=pl.BlockSpec((1, BT), lambda i: (i, 0)),  # lane-dense row
        compiler_params=pltpu.CompilerParams(
            dimension_semantics=("parallel",),
            vmem_limit_bytes=32 * 1024 * 1024),
    )(x, w1, b1, w2, b2, w3, b3)

    # (num_steps, BT) row-major == batch order; drop the OOB tail rows.
    return out.reshape(-1, 1)[:B]


def init_params(key, n_observations, hidden=64):
    """nn.Linear-style U(-1/sqrt(fan_in), 1/sqrt(fan_in)) init, PyTorch layout."""
    ks = jax.random.split(key, 6)

    def linear(kw, kb, fan_in, fan_out):
        bound = 1.0 / jnp.sqrt(jnp.float32(fan_in))
        w = jax.random.uniform(kw, (fan_out, fan_in), jnp.float32, -bound, bound)
        b = jax.random.uniform(kb, (fan_out, 1), jnp.float32, -bound, bound)
        return w, b

    w1, b1 = linear(ks[0], ks[1], n_observations, hidden)
    w2, b2 = linear(ks[2], ks[3], hidden, hidden)
    w3, b3 = linear(ks[4], ks[5], hidden, 1)
    return {"w1": w1, "b1": b1, "w2": w2, "b2": b2, "w3": w3, "b3": b3}


def reference_forward(x, p):
    # Pure f32 reference: y = x @ W^T + b per layer (PyTorch semantics).
    h1 = jnp.maximum(x @ p["w1"].T + p["b1"].T, 0.0)
    h2 = jnp.maximum(h1 @ p["w2"].T + p["b2"].T, 0.0)
    return h2 @ p["w3"].T + p["b3"].T


if __name__ == "__main__":
    key = jax.random.PRNGKey(0)
    k_param, k_x1, k_x2 = jax.random.split(key, 3)

    n_observations = 32
    params = init_params(k_param, n_observations)

    # Case 1: tiny batch -> single full-array block (BT == B == 8).
    x_small = jax.random.normal(k_x1, (8, n_observations), jnp.float32)
    out_small = jax.block_until_ready(value_approximator(x_small, params))
    ref_small = reference_forward(x_small, params)
    assert out_small.shape == (8, 1)
    # bf16 weights/activations -> loose tolerance vs the f32 reference.
    assert jnp.allclose(out_small, ref_small, atol=3e-2, rtol=3e-2)

    # Case 2: multi-step grid with a partial last tile (600 rows, BT=256 ->
    # 3 grid steps; exercises OOB-row discard + lane-dense output relayout).
    x_big = jax.random.normal(k_x2, (600, n_observations), jnp.float32)
    out_big = jax.block_until_ready(
        value_approximator(x_big, params, block_rows=256))
    ref_big = reference_forward(x_big, params)
    assert out_big.shape == (600, 1)
    assert jnp.allclose(out_big, ref_big, atol=3e-2, rtol=3e-2)

    print("KERNEL_OK")
</pallas_src>

<mosaic_0001>
module attributes {stable_mosaic.version = 11 : i64} {
  func.func @_mlp_kernel(%arg0: i32, %arg1: memref<8x32xf32, #tpu.memory_space<vmem>>, %arg2: memref<64x32xbf16, #tpu.memory_space<vmem>>, %arg3: memref<64x1xf32, #tpu.memory_space<vmem>>, %arg4: memref<64x64xbf16, #tpu.memory_space<vmem>>, %arg5: memref<64x1xf32, #tpu.memory_space<vmem>>, %arg6: memref<1x64xbf16, #tpu.memory_space<vmem>>, %arg7: memref<1x1xf32, #tpu.memory_space<vmem>>, %arg8: memref<1x8xf32, #tpu.memory_space<vmem>>) attributes {dimension_semantics = [#tpu.dimension_semantics<parallel>], iteration_bounds = array<i64: 1>, scalar_prefetch = 0 : i64, scratch_operands = 0 : i64, tpu.core_type = #tpu.core_type<tc>, window_params = [{transform_indices = @transform_0, window_bounds = array<i64: 8, 32>}, {pipeline_mode = #tpu.pipeline_mode<synchronous>, transform_indices = @transform_1, window_bounds = array<i64: 64, 32>}, {pipeline_mode = #tpu.pipeline_mode<synchronous>, transform_indices = @transform_2, window_bounds = array<i64: 64, 1>}, {pipeline_mode = #tpu.pipeline_mode<synchronous>, transform_indices = @transform_3, window_bounds = array<i64: 64, 64>}, {pipeline_mode = #tpu.pipeline_mode<synchronous>, transform_indices = @transform_4, window_bounds = array<i64: 64, 1>}, {pipeline_mode = #tpu.pipeline_mode<synchronous>, transform_indices = @transform_5, window_bounds = array<i64: 1, 64>}, {pipeline_mode = #tpu.pipeline_mode<synchronous>, transform_indices = @transform_6, window_bounds = array<i64: 1, 1>}, {transform_indices = @transform_7, window_bounds = array<i64: 1, 8>}]} {
    %c0 = arith.constant 0 : index
    %c0_0 = arith.constant 0 : index
    %0 = vector.load %arg1[%c0, %c0_0] : memref<8x32xf32, #tpu.memory_space<vmem>>, vector<8x32xf32>
    %1 = arith.truncf %0 : vector<8x32xf32> to vector<8x32xbf16>
    %c0_1 = arith.constant 0 : index
    %c0_2 = arith.constant 0 : index
    %2 = vector.load %arg2[%c0_1, %c0_2] : memref<64x32xbf16, #tpu.memory_space<vmem>>, vector<64x32xbf16>
    %cst = arith.constant dense<0.000000e+00> : vector<64x8xf32>
    %3 = tpu.matmul %2, %1, %cst {dimension_numbers = #tpu.dot_dimension_numbers<[1], [1], [0], [0], [0, 0, 1, 0], [], []>} : vector<64x32xbf16>, vector<8x32xbf16>, vector<64x8xf32> -> vector<64x8xf32>
    %c0_3 = arith.constant 0 : index
    %c0_4 = arith.constant 0 : index
    %4 = vector.load %arg3[%c0_3, %c0_4] : memref<64x1xf32, #tpu.memory_space<vmem>>, vector<64x1xf32>
    %5 = vector.broadcast %4 : vector<64x1xf32> to vector<64x8xf32>
    %6 = arith.addf %3, %5 : vector<64x8xf32>
    %cst_5 = arith.constant 0.000000e+00 : f32
    %7 = vector.broadcast %cst_5 : f32 to vector<64x8xf32>
    %8 = arith.maximumf %6, %7 : vector<64x8xf32>
    %c0_6 = arith.constant 0 : index
    %c0_7 = arith.constant 0 : index
    %9 = vector.load %arg4[%c0_6, %c0_7] : memref<64x64xbf16, #tpu.memory_space<vmem>>, vector<64x64xbf16>
    %10 = arith.truncf %8 : vector<64x8xf32> to vector<64x8xbf16>
    %cst_8 = arith.constant dense<0.000000e+00> : vector<64x8xf32>
    %11 = tpu.matmul %9, %10, %cst_8 {dimension_numbers = #tpu.dot_dimension_numbers<[1], [0], [0], [1], [0, 0, 1, 1], [], []>} : vector<64x64xbf16>, vector<64x8xbf16>, vector<64x8xf32> -> vector<64x8xf32>
    %c0_9 = arith.constant 0 : index
    %c0_10 = arith.constant 0 : index
    %12 = vector.load %arg5[%c0_9, %c0_10] : memref<64x1xf32, #tpu.memory_space<vmem>>, vector<64x1xf32>
    %13 = vector.broadcast %12 : vector<64x1xf32> to vector<64x8xf32>
    %14 = arith.addf %11, %13 : vector<64x8xf32>
    %cst_11 = arith.constant 0.000000e+00 : f32
    %15 = vector.broadcast %cst_11 : f32 to vector<64x8xf32>
    %16 = arith.maximumf %14, %15 : vector<64x8xf32>
    %c0_12 = arith.constant 0 : index
    %c0_13 = arith.constant 0 : index
    %17 = vector.load %arg6[%c0_12, %c0_13] : memref<1x64xbf16, #tpu.memory_space<vmem>>, vector<1x64xbf16>
    %18 = arith.truncf %16 : vector<64x8xf32> to vector<64x8xbf16>
    %cst_14 = arith.constant dense<0.000000e+00> : vector<1x8xf32>
    %19 = tpu.matmul %17, %18, %cst_14 {dimension_numbers = #tpu.dot_dimension_numbers<[1], [0], [0], [1], [0, 0, 1, 1], [], []>} : vector<1x64xbf16>, vector<64x8xbf16>, vector<1x8xf32> -> vector<1x8xf32>
    %c0_15 = arith.constant 0 : index
    %c0_16 = arith.constant 0 : index
    %20 = vector.load %arg7[%c0_15, %c0_16] : memref<1x1xf32, #tpu.memory_space<vmem>>, vector<1x1xf32>
    %21 = vector.broadcast %20 : vector<1x1xf32> to vector<1x8xf32>
    %22 = arith.addf %19, %21 : vector<1x8xf32>
    %c0_17 = arith.constant 0 : index
    %c0_18 = arith.constant 0 : index
    %23 = vector.load %arg8[%c0_17, %c0_18] : memref<1x8xf32, #tpu.memory_space<vmem>>, vector<1x8xf32>
    tpu.vector_store %arg8[%c0_17, %c0_18], %22 {strides = array<i32>} : memref<1x8xf32, #tpu.memory_space<vmem>>, vector<1x8xf32>,
    return
  }
  func.func @transform_0(%arg0: i32) -> (i32, i32) {
    %c0_i32 = arith.constant 0 : i32
    %c0_i32_0 = arith.constant 0 : i32
    return %arg0, %c0_i32 : i32, i32
  }
  func.func @transform_1(%arg0: i32) -> (i32, i32) {
    %c0_i32 = arith.constant 0 : i32
    %c0_i32_0 = arith.constant 0 : i32
    %c0_i32_1 = arith.constant 0 : i32
    return %c0_i32, %c0_i32_0 : i32, i32
  }
  func.func @transform_2(%arg0: i32) -> (i32, i32) {
    %c0_i32 = arith.constant 0 : i32
    %c0_i32_0 = arith.constant 0 : i32
    %c0_i32_1 = arith.constant 0 : i32
    return %c0_i32, %c0_i32_0 : i32, i32
  }
  func.func @transform_3(%arg0: i32) -> (i32, i32) {
    %c0_i32 = arith.constant 0 : i32
    %c0_i32_0 = arith.constant 0 : i32
    %c0_i32_1 = arith.constant 0 : i32
    return %c0_i32, %c0_i32_0 : i32, i32
  }
  func.func @transform_4(%arg0: i32) -> (i32, i32) {
    %c0_i32 = arith.constant 0 : i32
    %c0_i32_0 = arith.constant 0 : i32
    %c0_i32_1 = arith.constant 0 : i32
    return %c0_i32, %c0_i32_0 : i32, i32
  }
  func.func @transform_5(%arg0: i32) -> (i32, i32) {
    %c0_i32 = arith.constant 0 : i32
    %c0_i32_0 = arith.constant 0 : i32
    %c0_i32_1 = arith.constant 0 : i32
    return %c0_i32, %c0_i32_0 : i32, i32
  }
  func.func @transform_6(%arg0: i32) -> (i32, i32) {
    %c0_i32 = arith.constant 0 : i32
    %c0_i32_0 = arith.constant 0 : i32
    %c0_i32_1 = arith.constant 0 : i32
    return %c0_i32, %c0_i32_0 : i32, i32
  }
  func.func @transform_7(%arg0: i32) -> (i32, i32) {
    %c0_i32 = arith.constant 0 : i32
    %c0_i32_0 = arith.constant 0 : i32
    return %arg0, %c0_i32 : i32, i32
  }
}

</mosaic_0001>

<llo_original>
// kernel: tpu_custom_call.1
$region0: #{tpu_custom_call.1}
  #allocation0 [shape = 'u32[]', space=smem, size = 0x4, offset = 0x4, fixed_abs, tag = 'smem constant byte address 0x4 - core index']
  #allocation1 [shape = 'u32[72,128]{1,0:T(1,128)}', space=vmem, size = 0x9000, scoped, tag = 'internal scratch']
  #allocation2 [shape = 'f32[1,1]{1,0:T(1,128)S(1)}', space=vmem, size = 0x200, scoped, tag = 'scoped memory for tpu_custom_call.1']
  %s0 = inlined_call_operand.vmem [shape: f32[8,32], index: 0, kind: input, shape index: {}]
  %s1 = inlined_call_operand.vmem [shape: bf16[64,32], index: 1, kind: input, shape index: {}]
  %s2 = inlined_call_operand.vmem [shape: f32[64,1], index: 2, kind: input, shape index: {}]
  %s3 = inlined_call_operand.vmem [shape: bf16[64,64], index: 3, kind: input, shape index: {}]
  %s4 = inlined_call_operand.vmem [shape: f32[64,1], index: 4, kind: input, shape index: {}]
  %s5 = inlined_call_operand.vmem [shape: bf16[1,64], index: 5, kind: input, shape index: {}]
  %s6 = inlined_call_operand.<no memory space> [shape: f32[1,1], index: 6, kind: input, shape index: {}]
  %s7 = inlined_call_operand.hbm [shape: f32[1,8], index: 7, kind: output, shape index: {}]
  %s8 = sld [smem:[#allocation0]]
  $region38: #{tpu_custom_call.1} parent=0
    _
  %s10 = ssub.s32 1, %s8
  %s11 = scalar_select 0, %s10, %s8
  %v12 = vstv %s6
  %13 = vst [vmem:[#allocation2] sm:$0x1] %v12
  $region1: #{tpu_custom_call.1} parent=0
    #allocation3 [shape = 'u8[512]{0}', space=vmem, size = 0x400, scoped, tag = 'output window, operand 0, single buffered']
    #allocation4 [shape = 's32[1]{0}', space=sflag, size = 0x4, scoped, tag = 'scoped memory for tpu_custom_call.1']
    %14 = vsyncpa [#allocation4], 0
    // Predicated region
    $region2: #{tpu_custom_call.1} parent=1 // pred_check
      _
    $region3: #{tpu_custom_call.1} parent=1 // pred_check_branch
      %16 = sbr.rel (0) target = $region5
    $region4: #{tpu_custom_call.1} parent=1 // pred_region
      _
    $region5: #{tpu_custom_call.1} parent=1 // pred_fallthru
      _
    // Predicated region
    $region6: #{tpu_custom_call.1} parent=1 // pred_check
      _
    $region7: #{tpu_custom_call.1} parent=1 // pred_check_branch
      %18 = sbr.rel (0) target = $region9
    $region8: #{tpu_custom_call.1} parent=1 // pred_region
      _
    $region9: #{tpu_custom_call.1} parent=1 // pred_fallthru
      _
    // Predicated region
    $region10: #{tpu_custom_call.1} parent=1 // pred_check
      _
    $region11: #{tpu_custom_call.1} parent=1 // pred_check_branch
      %20 = sbr.rel (0) target = $region13
    $region12: #{tpu_custom_call.1} parent=1 // pred_region
      _
    $region13: #{tpu_custom_call.1} parent=1 // pred_fallthru
      _
    // Predicated region
    $region14: #{tpu_custom_call.1} parent=1 // pred_check
      _
    $region15: #{tpu_custom_call.1} parent=1 // pred_check_branch
      %22 = sbr.rel (0) target = $region17
    $region16: #{tpu_custom_call.1} parent=1 // pred_region
      _
    $region17: #{tpu_custom_call.1} parent=1 // pred_fallthru
      _
    // Predicated region
    $region18: #{tpu_custom_call.1} parent=1 // pred_check
      _
    $region19: #{tpu_custom_call.1} parent=1 // pred_check_branch
      %24 = sbr.rel (0) target = $region21
    $region20: #{tpu_custom_call.1} parent=1 // pred_region
      _
    $region21: #{tpu_custom_call.1} parent=1 // pred_fallthru
      _
    // Predicated region
    $region22: #{tpu_custom_call.1} parent=1 // pred_check
      _
    $region23: #{tpu_custom_call.1} parent=1 // pred_check_branch
      %26 = sbr.rel (0) target = $region25
    $region24: #{tpu_custom_call.1} parent=1 // pred_region
      _
    $region25: #{tpu_custom_call.1} parent=1 // pred_fallthru
      _
    // Predicated region
    $region26: #{tpu_custom_call.1} parent=1 // pred_check
      _
    $region27: #{tpu_custom_call.1} parent=1 // pred_check_branch
      %28 = sbr.rel (0) target = $region29
    $region28: #{tpu_custom_call.1} parent=1 // pred_region
      _
    $region29: #{tpu_custom_call.1} parent=1 // pred_fallthru
      _
    %v30 = vld [vmem:[%s0] sm:$0xff]
    %v31 = vpack.c.bf16 %v30, %v30
    %v32 = vld [vmem:[%s1] sm:$0xf]
    %v33 = vld [vmem:[%s1 + $0x4] sm:$0xf]
    %v34 = vld [vmem:[%s1 + $0x8] sm:$0xf]
    %v35 = vld [vmem:[%s1 + $0xc] sm:$0xf]
    %v36 = vld [vmem:[%s1 + $0x10] sm:$0xf]
    %v37 = vld [vmem:[%s1 + $0x14] sm:$0xf]
    %v38 = vld [vmem:[%s1 + $0x18] sm:$0xf]
    %v39 = vld [vmem:[%s1 + $0x1c] sm:$0xf]
    %v40 = vld [vmem:[%s2] sm:$0xff]
    %v41 = vld [vmem:[%s2 + $0x8] sm:$0xff]
    %v42 = vld [vmem:[%s2 + $0x10] sm:$0xff]
    %v43 = vld [vmem:[%s2 + $0x18] sm:$0xff]
    %v44 = vld [vmem:[%s2 + $0x20] sm:$0xff]
    %v45 = vld [vmem:[%s2 + $0x28] sm:$0xff]
    %v46 = vld [vmem:[%s2 + $0x30] sm:$0xff]
    %v47 = vld [vmem:[%s2 + $0x38] sm:$0xff]
    %49 = vset.pattern.permute.xlu0 0
    %50 = vperm.xlu0 %49, %v40
    %v51 = vpop.permute.xlu0 %50
    %54 = vset.pattern.permute.xlu0 0
    %55 = vperm.xlu0 %54, %v41
    %v56 = vpop.permute.xlu0 %55
    %59 = vset.pattern.permute.xlu0 0
    %60 = vperm.xlu0 %59, %v42
    %v61 = vpop.permute.xlu0 %60
    %64 = vset.pattern.permute.xlu0 0
    %65 = vperm.xlu0 %64, %v43
    %v66 = vpop.permute.xlu0 %65
    %69 = vset.pattern.permute.xlu0 0
    %70 = vperm.xlu0 %69, %v44
    %v71 = vpop.permute.xlu0 %70
    %74 = vset.pattern.permute.xlu0 0
    %75 = vperm.xlu0 %74, %v45
    %v76 = vpop.permute.xlu0 %75
    %79 = vset.pattern.permute.xlu0 0
    %80 = vperm.xlu0 %79, %v46
    %v81 = vpop.permute.xlu0 %80
    %84 = vset.pattern.permute.xlu0 0
    %85 = vperm.xlu0 %84, %v47
    %v86 = vpop.permute.xlu0 %85
    %v96 = vunpack.c.l.b16 %v32
    %v97 = vunpack.c.l.b16 %v33
    %v98 = vunpack.c.l.b16 %v34
    %v99 = vunpack.c.l.b16 %v35
    %v100 = vunpack.c.l.b16 %v36
    %v101 = vunpack.c.l.b16 %v37
    %v102 = vunpack.c.l.b16 %v38
    %v103 = vunpack.c.l.b16 %v39
    %v104 = vpack.c.b16 %v97, %v96
    %v105 = vpack.c.b16 %v99, %v98
    %v106 = vpack.c.b16 %v101, %v100
    %v107 = vpack.c.b16 %v103, %v102
    %vm108 = vcmask 261120
    %v110 = vsel %vm108, %v104, 0
    %v113 = vsel %vm108, %v105, 0
    %v116 = vsel %vm108, %v106, 0
    %v119 = vsel %vm108, %v107, 0
    %v122 = vsel %vm108, %v31, 0
    %124 = vmatpush.bf16.xpose.msra.mxu0 0
    %125 = vmatpush.bf16.xpose.msra.mxu0 0
    %126 = vmatpush.bf16.xpose.msra.mxu0 0
    %127 = vmatpush.bf16.xpose.msra.mxu0 0
    %128 = vmatpush.bf16.xpose.msra.mxu0 0
    %129 = vmatpush.bf16.xpose.msra.mxu0 0
    %130 = vmatpush.bf16.xpose.msra.mxu0 0
    %131 = vmatpush.bf16.xpose.msra.mxu0 %v122
    %132 = vmatmul.bf16.gmra.mxu0 %v110
    %v133 = vpop.f32.mrf.mxu0
    %v134 = vadd.f32 %v51, %v133
    %v135 = vpop.f32.mrf.mxu0
    %v136 = vadd.f32 %v56, %v135
    %137 = vmatmul.bf16.gmra.mxu0 %v113
    %v138 = vpop.f32.mrf.mxu0
    %v139 = vadd.f32 %v61, %v138
    %v140 = vpop.f32.mrf.mxu0
    %v141 = vadd.f32 %v66, %v140
    %142 = vmatmul.bf16.gmra.mxu0 %v116
    %v143 = vpop.f32.mrf.mxu0
    %v144 = vadd.f32 %v71, %v143
    %v145 = vpop.f32.mrf.mxu0
    %v146 = vadd.f32 %v76, %v145
    %147 = vmatmul.bf16.gmra.mxu0 %v119
    %v148 = vpop.f32.mrf.mxu0
    %v149 = vadd.f32 %v81, %v148
    %v150 = vpop.f32.mrf.mxu0
    %v151 = vadd.f32 %v86, %v150
    %152 = vdwg.mxu0
    %v153 = vmax.f32 %v134, 0.0
    %v154 = vmax.f32 %v136, 0.0
    %v155 = vmax.f32 %v139, 0.0
    %v156 = vmax.f32 %v141, 0.0
    %v157 = vmax.f32 %v144, 0.0
    %v158 = vmax.f32 %v146, 0.0
    %v159 = vmax.f32 %v149, 0.0
    %v160 = vmax.f32 %v151, 0.0
    %v161 = vld [vmem:[%s3] sm:$0xf]
    %v162 = vld [vmem:[%s3 + $0x4] sm:$0xf]
    %v163 = vld [vmem:[%s3 + $0x8] sm:$0xf]
    %v164 = vld [vmem:[%s3 + $0xc] sm:$0xf]
    %v165 = vld [vmem:[%s3 + $0x10] sm:$0xf]
    %v166 = vld [vmem:[%s3 + $0x14] sm:$0xf]
    %v167 = vld [vmem:[%s3 + $0x18] sm:$0xf]
    %v168 = vld [vmem:[%s3 + $0x1c] sm:$0xf]
    %v169 = vpack.c.bf16 %v154, %v153
    %v170 = vpack.c.bf16 %v156, %v155
    %v171 = vpack.c.bf16 %v158, %v157
    %v172 = vpack.c.bf16 %v160, %v159
    %v173 = vld [vmem:[%s4] sm:$0xff]
    %v174 = vld [vmem:[%s4 + $0x8] sm:$0xff]
    %v175 = vld [vmem:[%s4 + $0x10] sm:$0xff]
    %v176 = vld [vmem:[%s4 + $0x18] sm:$0xff]
    %v177 = vld [vmem:[%s4 + $0x20] sm:$0xff]
    %v178 = vld [vmem:[%s4 + $0x28] sm:$0xff]
    %v179 = vld [vmem:[%s4 + $0x30] sm:$0xff]
    %v180 = vld [vmem:[%s4 + $0x38] sm:$0xff]
    %182 = vset.pattern.permute.xlu0 0
    %183 = vperm.xlu0 %182, %v173
    %v184 = vpop.permute.xlu0 %183
    %187 = vset.pattern.permute.xlu0 0
    %188 = vperm.xlu0 %187, %v174
    %v189 = vpop.permute.xlu0 %188
    %192 = vset.pattern.permute.xlu0 0
    %193 = vperm.xlu0 %192, %v175
    %v194 = vpop.permute.xlu0 %193
    %197 = vset.pattern.permute.xlu0 0
    %198 = vperm.xlu0 %197, %v176
    %v199 = vpop.permute.xlu0 %198
    %202 = vset.pattern.permute.xlu0 0
    %203 = vperm.xlu0 %202, %v177
    %v204 = vpop.permute.xlu0 %203
    %207 = vset.pattern.permute.xlu0 0
    %208 = vperm.xlu0 %207, %v178
    %v209 = vpop.permute.xlu0 %208
    %212 = vset.pattern.permute.xlu0 0
    %213 = vperm.xlu0 %212, %v179
    %v214 = vpop.permute.xlu0 %213
    %217 = vset.pattern.permute.xlu0 0
    %218 = vperm.xlu0 %217, %v180
    %v219 = vpop.permute.xlu0 %218
    %v229 = vunpack.c.l.b16 %v161
    %v230 = vunpack.c.l.b16 %v162
    %v231 = vunpack.c.l.b16 %v163
    %v232 = vunpack.c.l.b16 %v164
    %v233 = vunpack.c.l.b16 %v165
    %v234 = vunpack.c.l.b16 %v166
    %v235 = vunpack.c.l.b16 %v167
    %v236 = vunpack.c.l.b16 %v168
    %v237 = vpack.c.b16 %v230, %v229
    %v238 = vpack.c.b16 %v232, %v231
    %v239 = vpack.c.b16 %v234, %v233
    %v240 = vpack.c.b16 %v236, %v235
    %vm241 = vcmask 523264
    %v243 = vsel %vm241, %v237, 0
    %v246 = vsel %vm241, %v238, 0
    %v249 = vsel %vm241, %v239, 0
    %v252 = vsel %vm241, %v240, 0
    %254 = vmatpush.bf16.msra.mxu0 0
    %255 = vmatpush.bf16.msra.mxu0 0
    %256 = vmatpush.bf16.msra.mxu0 0
    %257 = vmatpush.bf16.msra.mxu0 0
    %258 = vmatpush.bf16.msra.mxu0 %v172
    %259 = vmatpush.bf16.msra.mxu0 %v171
    %260 = vmatpush.bf16.msra.mxu0 %v170
    %261 = vmatpush.bf16.msra.mxu0 %v169
    %262 = vmatmul.bf16.gmra.mxu0 %v243
    %v263 = vpop.f32.mrf.mxu0
    %v264 = vadd.f32 %v184, %v263
    %v265 = vpop.f32.mrf.mxu0
    %v266 = vadd.f32 %v189, %v265
    %267 = vmatmul.bf16.gmra.mxu0 %v246
    %v268 = vpop.f32.mrf.mxu0
    %v269 = vadd.f32 %v194, %v268
    %v270 = vpop.f32.mrf.mxu0
    %v271 = vadd.f32 %v199, %v270
    %272 = vmatmul.bf16.gmra.mxu0 %v249
    %v273 = vpop.f32.mrf.mxu0
    %v274 = vadd.f32 %v204, %v273
    %v275 = vpop.f32.mrf.mxu0
    %v276 = vadd.f32 %v209, %v275
    %277 = vmatmul.bf16.gmra.mxu0 %v252
    %v278 = vpop.f32.mrf.mxu0
    %v279 = vadd.f32 %v214, %v278
    %v280 = vpop.f32.mrf.mxu0
    %v281 = vadd.f32 %v219, %v280
    %282 = vdwg.mxu0
    %v283 = vmax.f32 %v264, 0.0
    %v284 = vmax.f32 %v266, 0.0
    %v285 = vmax.f32 %v269, 0.0
    %v286 = vmax.f32 %v271, 0.0
    %v287 = vmax.f32 %v274, 0.0
    %v288 = vmax.f32 %v276, 0.0
    %v289 = vmax.f32 %v279, 0.0
    %v290 = vmax.f32 %v281, 0.0
    %v291 = vld [vmem:[%s5] sm:$0x1]
    %v292 = vpack.c.bf16 %v284, %v283
    %v293 = vpack.c.bf16 %v286, %v285
    %v294 = vpack.c.bf16 %v288, %v287
    %v295 = vpack.c.bf16 %v290, %v289
    %v296 = vld [vmem:[#allocation2] sm:$0x1]
    %298 = vset.pattern.permute.xlu0 0
    %299 = vperm.xlu0 %298, %v296
    %v300 = vpop.permute.xlu0 %299
    %v302 = vperm.slane %v300, 0
    %v304 = vsel %vm241, %v291, 0
    %306 = vmatpush.bf16.msra.mxu0 0
    %307 = vmatpush.bf16.msra.mxu0 0
    %308 = vmatpush.bf16.msra.mxu0 0
    %309 = vmatpush.bf16.msra.mxu0 0
    %310 = vmatpush.bf16.msra.mxu0 %v295
    %311 = vmatpush.bf16.msra.mxu0 %v294
    %312 = vmatpush.bf16.msra.mxu0 %v293
    %313 = vmatpush.bf16.msra.mxu0 %v292
    %314 = vmatmul.bf16.gmra.mxu0 %v304
    %v315 = vpop.f32.mrf.mxu0
    %v316 = vadd.f32 %v302, %v315
    %v317 = vpop.f32.mrf.mxu0
    %318 = vdwg.mxu0
    %vm319 = vcmask 57344
    %320 = vst.msk [vmem:[#allocation3] sm:$0x1] %vm319, %v316
    // Predicated region
    $region30: #{tpu_custom_call.1} parent=1 // pred_check
      _
    $region31: #{tpu_custom_call.1} parent=1 // pred_check_branch
      %322 = sbr.rel (0) target = $region33
    $region32: #{tpu_custom_call.1} parent=1 // pred_region
      %324 = vsyncadd [#allocation4], 0
      %s326 = sshll.u32 [#allocation3], 4
      %s327 = int_to_ptr.vmem [resolvable:$true] %s326
      %s328 = sshll.u32 %s7, 4
      %s329 = int_to_ptr.hbm [resolvable:$true] %s328
      %331 = dma.vmem_to_hbm [thread:$0]  %s327, 16, %s329, [#allocation4]
    $region33: #{tpu_custom_call.1} parent=1 // pred_fallthru
      _
    // Predicated region
    $region34: #{tpu_custom_call.1} parent=1 // pred_check
      _
    $region35: #{tpu_custom_call.1} parent=1 // pred_check_branch
      %333 = sbr.rel (0) target = $region37
    $region36: #{tpu_custom_call.1} parent=1 // pred_region
      %335 = dma.done [#allocation4], 16
    $region37: #{tpu_custom_call.1} parent=1 // pred_fallthru
      _
    %336 = vsyncpa [#allocation4], 1

</llo_original>
